<compile_context>
chip_gen: v6e
topology: v6e:2x2x1
jax: 0.10.0
libtpu: 0.0.40
codegen_flags: <defaults>
</compile_context>

<pallas_src>
import jax
import jax.numpy as jnp
from jax.experimental import pallas as pl
from jax.experimental.pallas import tpu as pltpu

_HIDDEN1 = 128
_HIDDEN2 = 32
_SUBLANE = 8


def _round_up(x, m):
    return (x + m - 1) // m * m


def _cdiv(a, b):
    return (a + b - 1) // b


def dqn_kernel(x_ref, w1_ref, b1_ref, w2_ref, b2_ref, w3_ref, b3_ref, o_ref):
    # Matmul operand dtype follows the (optionally pre-cast bf16) weights.
    # Accumulation is always f32 via preferred_element_type; biases stay f32.
    w1 = w1_ref[...]
    w2 = w2_ref[...]
    w3 = w3_ref[...]
    mm = w1.dtype

    # layer1 + ReLU
    h1 = jnp.dot(x_ref[...].astype(mm), w1,
                 preferred_element_type=jnp.float32) + b1_ref[...]
    h1 = jnp.maximum(h1, 0.0)

    # layer2 + ReLU
    h2 = jnp.dot(h1.astype(mm), w2,
                 preferred_element_type=jnp.float32) + b2_ref[...]
    h2 = jnp.maximum(h2, 0.0)

    # layer3 = Dropout(0.2): identity in eval/inference mode (PyTorch semantics).
    # TODO(synk): training-mode dropout (pltpu.prng_seed + pltpu.prng_random_bits
    # mask scaled by 1/(1-p)) is not emitted here.

    # layer4 (natural n_actions width -> a few masked stores, no padded writeback)
    y = jnp.dot(h2.astype(mm), w3,
                preferred_element_type=jnp.float32) + b3_ref[...]
    o_ref[...] = y.astype(o_ref.dtype)


def dqn_forward(x, params, *, tile_b=1024):
    """x: (B, n_observations) f32.

    params: dict of transposed weights (in, out) + biases (1, out). Weights may
    be f32 (exact PyTorch parity) or pre-cast bf16 (v6e/v7x MXU fast path, see
    cast_weights_bf16); biases must stay f32.
    """
    w1, b1 = params["w1"], params["b1"]
    w2, b2 = params["w2"], params["b2"]
    w3, b3 = params["w3"], params["b3"]

    B, n_obs = x.shape
    n_actions = w3.shape[1]

    # Batch tiling without any pad/slice round trips:
    #  * B <= 8: one block whose row dim == B (always legal).
    #  * else: tile is a multiple of 8, capped at tile_b and at ceil(B/2) so the
    #    grid has >= 2 steps (v7x megacore); a ragged tail block is masked by
    #    Pallas, no jnp.pad needed.
    if B <= _SUBLANE:
        tile = B
    else:
        tile = min(_round_up(tile_b, _SUBLANE), _round_up(_cdiv(B, 2), _SUBLANE))
    grid = (_cdiv(B, tile),)

    # Weights/biases: constant index_map -> DMA'd once, VMEM-resident across steps.
    resident = lambda shape: pl.BlockSpec(shape, lambda i: (0, 0))

    flops = 2 * B * (n_obs * _HIDDEN1 + _HIDDEN1 * _HIDDEN2 + _HIDDEN2 * n_actions)
    bytes_accessed = (
        x.size * x.dtype.itemsize
        + sum(a.size * a.dtype.itemsize for a in (w1, b1, w2, b2, w3, b3))
        + B * n_actions * 4)

    return pl.pallas_call(
        dqn_kernel,
        out_shape=jax.ShapeDtypeStruct((B, n_actions), jnp.float32),
        grid=grid,
        in_specs=[
            pl.BlockSpec((tile, n_obs), lambda i: (i, 0)),
            resident(w1.shape), resident(b1.shape),
            resident(w2.shape), resident(b2.shape),
            resident(w3.shape), resident(b3.shape),
        ],
        out_specs=pl.BlockSpec((tile, n_actions), lambda i: (i, 0)),
        compiler_params=pltpu.CompilerParams(dimension_semantics=("parallel",)),
        cost_estimate=pl.CostEstimate(flops=flops, bytes_accessed=bytes_accessed,
                                      transcendentals=0),
    )(x, w1, b1, w2, b2, w3, b3)


def cast_weights_bf16(params):
    """Pre-cast matmul weights to bf16 once (wrapper/param-prep side).

    Removes the per-grid-step in-kernel VPU casts, halves weight DMA bytes, and
    hits the native bf16 MXU rate on v6e/v7x. Biases stay f32; accumulation
    stays f32 inside the kernel.
    """
    out = dict(params)
    for k in ("w1", "w2", "w3"):
        out[k] = params[k].astype(jnp.bfloat16)
    return out


def init_params(key, n_observations, n_actions):
    """Deterministic init mimicking PyTorch nn.Linear default (U[-1/sqrt(fan_in), +])."""
    def linear(key, fan_in, fan_out):
        kw, kb = jax.random.split(key)
        bound = 1.0 / (fan_in ** 0.5)
        # stored already transposed: (in, out)
        w = jax.random.uniform(kw, (fan_in, fan_out), jnp.float32, -bound, bound)
        b = jax.random.uniform(kb, (1, fan_out), jnp.float32, -bound, bound)
        return w, b

    k1, k2, k3 = jax.random.split(key, 3)
    w1, b1 = linear(k1, n_observations, _HIDDEN1)
    w2, b2 = linear(k2, _HIDDEN1, _HIDDEN2)
    w3, b3 = linear(k3, _HIDDEN2, n_actions)
    return {"w1": w1, "b1": b1, "w2": w2, "b2": b2, "w3": w3, "b3": b3}


def _ref_forward(x, params):
    h1 = jnp.maximum(x @ params["w1"] + params["b1"], 0.0)
    h2 = jnp.maximum(h1 @ params["w2"] + params["b2"], 0.0)
    return h2 @ params["w3"] + params["b3"]   # dropout is identity in eval mode


if __name__ == "__main__":
    key = jax.random.PRNGKey(0)
    n_observations, n_actions, batch = 8, 4, 4

    kp, kx = jax.random.split(key)
    params = init_params(kp, n_observations, n_actions)
    x = jax.random.normal(kx, (batch, n_observations), jnp.float32)

    # f32 path (default): exact match vs the PyTorch eval-mode forward.
    y = jax.block_until_ready(dqn_forward(x, params))
    y_ref = _ref_forward(x, params)
    assert y.shape == (batch, n_actions)
    assert jnp.allclose(y, y_ref, atol=1e-5, rtol=1e-5)

    # bf16-weight path (v6e/v7x MXU rate): weights pre-cast once, f32 accumulate.
    params_bf16 = cast_weights_bf16(params)
    y_bf16 = jax.block_until_ready(dqn_forward(x, params_bf16))
    assert y_bf16.shape == (batch, n_actions)
    assert jnp.allclose(y_bf16, y_ref, atol=5e-2, rtol=5e-2)

    # Ragged multi-step batch: exercises the >=2-step grid and the masked tail
    # block (no wrapper-side pad/slice).
    xb = jax.random.normal(jax.random.PRNGKey(1), (37, n_observations), jnp.float32)
    yb = jax.block_until_ready(dqn_forward(xb, params))
    assert yb.shape == (37, n_actions)
    assert jnp.allclose(yb, _ref_forward(xb, params), atol=1e-5, rtol=1e-5)

    print("KERNEL_OK")
</pallas_src>

<mosaic_0001>
module attributes {stable_mosaic.version = 11 : i64} {
  func.func @dqn_kernel(%arg0: i32, %arg1: memref<4x8xf32, #tpu.memory_space<vmem>>, %arg2: memref<8x128xf32, #tpu.memory_space<vmem>>, %arg3: memref<1x128xf32, #tpu.memory_space<vmem>>, %arg4: memref<128x32xf32, #tpu.memory_space<vmem>>, %arg5: memref<1x32xf32, #tpu.memory_space<vmem>>, %arg6: memref<32x4xf32, #tpu.memory_space<vmem>>, %arg7: memref<1x4xf32, #tpu.memory_space<vmem>>, %arg8: memref<4x4xf32, #tpu.memory_space<vmem>>) attributes {dimension_semantics = [#tpu.dimension_semantics<parallel>], iteration_bounds = array<i64: 1>, scalar_prefetch = 0 : i64, scratch_operands = 0 : i64, tpu.core_type = #tpu.core_type<tc>, window_params = [{transform_indices = @transform_0, window_bounds = array<i64: 4, 8>}, {pipeline_mode = #tpu.pipeline_mode<synchronous>, transform_indices = @transform_1, window_bounds = array<i64: 8, 128>}, {pipeline_mode = #tpu.pipeline_mode<synchronous>, transform_indices = @transform_2, window_bounds = array<i64: 1, 128>}, {pipeline_mode = #tpu.pipeline_mode<synchronous>, transform_indices = @transform_3, window_bounds = array<i64: 128, 32>}, {pipeline_mode = #tpu.pipeline_mode<synchronous>, transform_indices = @transform_4, window_bounds = array<i64: 1, 32>}, {pipeline_mode = #tpu.pipeline_mode<synchronous>, transform_indices = @transform_5, window_bounds = array<i64: 32, 4>}, {pipeline_mode = #tpu.pipeline_mode<synchronous>, transform_indices = @transform_6, window_bounds = array<i64: 1, 4>}, {transform_indices = @transform_7, window_bounds = array<i64: 4, 4>}]} {
    %c0 = arith.constant 0 : index
    %c0_0 = arith.constant 0 : index
    %0 = vector.load %arg2[%c0, %c0_0] : memref<8x128xf32, #tpu.memory_space<vmem>>, vector<8x128xf32>
    %c0_1 = arith.constant 0 : index
    %c0_2 = arith.constant 0 : index
    %1 = vector.load %arg4[%c0_1, %c0_2] : memref<128x32xf32, #tpu.memory_space<vmem>>, vector<128x32xf32>
    %c0_3 = arith.constant 0 : index
    %c0_4 = arith.constant 0 : index
    %2 = vector.load %arg6[%c0_3, %c0_4] : memref<32x4xf32, #tpu.memory_space<vmem>>, vector<32x4xf32>
    %c0_5 = arith.constant 0 : index
    %c0_6 = arith.constant 0 : index
    %3 = vector.load %arg1[%c0_5, %c0_6] : memref<4x8xf32, #tpu.memory_space<vmem>>, vector<4x8xf32>
    %cst = arith.constant dense<0.000000e+00> : vector<4x128xf32>
    %4 = tpu.matmul %3, %0, %cst {dimension_numbers = #tpu.dot_dimension_numbers<[1], [0], [0], [1], [0, 0, 1, 1], [], []>} : vector<4x8xf32>, vector<8x128xf32>, vector<4x128xf32> -> vector<4x128xf32>
    %c0_7 = arith.constant 0 : index
    %c0_8 = arith.constant 0 : index
    %5 = vector.load %arg3[%c0_7, %c0_8] : memref<1x128xf32, #tpu.memory_space<vmem>>, vector<1x128xf32>
    %6 = vector.broadcast %5 : vector<1x128xf32> to vector<4x128xf32>
    %7 = arith.addf %4, %6 : vector<4x128xf32>
    %cst_9 = arith.constant 0.000000e+00 : f32
    %8 = vector.broadcast %cst_9 : f32 to vector<4x128xf32>
    %9 = arith.maximumf %7, %8 : vector<4x128xf32>
    %cst_10 = arith.constant dense<0.000000e+00> : vector<4x32xf32>
    %10 = tpu.matmul %9, %1, %cst_10 {dimension_numbers = #tpu.dot_dimension_numbers<[1], [0], [0], [1], [0, 0, 1, 1], [], []>} : vector<4x128xf32>, vector<128x32xf32>, vector<4x32xf32> -> vector<4x32xf32>
    %c0_11 = arith.constant 0 : index
    %c0_12 = arith.constant 0 : index
    %11 = vector.load %arg5[%c0_11, %c0_12] : memref<1x32xf32, #tpu.memory_space<vmem>>, vector<1x32xf32>
    %12 = vector.broadcast %11 : vector<1x32xf32> to vector<4x32xf32>
    %13 = arith.addf %10, %12 : vector<4x32xf32>
    %cst_13 = arith.constant 0.000000e+00 : f32
    %14 = vector.broadcast %cst_13 : f32 to vector<4x32xf32>
    %15 = arith.maximumf %13, %14 : vector<4x32xf32>
    %cst_14 = arith.constant dense<0.000000e+00> : vector<4x4xf32>
    %16 = tpu.matmul %15, %2, %cst_14 {dimension_numbers = #tpu.dot_dimension_numbers<[1], [0], [0], [1], [0, 0, 1, 1], [], []>} : vector<4x32xf32>, vector<32x4xf32>, vector<4x4xf32> -> vector<4x4xf32>
    %c0_15 = arith.constant 0 : index
    %c0_16 = arith.constant 0 : index
    %17 = vector.load %arg7[%c0_15, %c0_16] : memref<1x4xf32, #tpu.memory_space<vmem>>, vector<1x4xf32>
    %18 = vector.broadcast %17 : vector<1x4xf32> to vector<4x4xf32>
    %19 = arith.addf %16, %18 : vector<4x4xf32>
    %c0_17 = arith.constant 0 : index
    %c0_18 = arith.constant 0 : index
    %20 = vector.load %arg8[%c0_17, %c0_18] : memref<4x4xf32, #tpu.memory_space<vmem>>, vector<4x4xf32>
    tpu.vector_store %arg8[%c0_17, %c0_18], %19 {strides = array<i32>} : memref<4x4xf32, #tpu.memory_space<vmem>>, vector<4x4xf32>,
    return
  }
  func.func @transform_0(%arg0: i32) -> (i32, i32) {
    %c0_i32 = arith.constant 0 : i32
    %c0_i32_0 = arith.constant 0 : i32
    return %arg0, %c0_i32 : i32, i32
  }
  func.func @transform_1(%arg0: i32) -> (i32, i32) {
    %c0_i32 = arith.constant 0 : i32
    %c0_i32_0 = arith.constant 0 : i32
    %c0_i32_1 = arith.constant 0 : i32
    return %c0_i32, %c0_i32_0 : i32, i32
  }
  func.func @transform_2(%arg0: i32) -> (i32, i32) {
    %c0_i32 = arith.constant 0 : i32
    %c0_i32_0 = arith.constant 0 : i32
    %c0_i32_1 = arith.constant 0 : i32
    return %c0_i32, %c0_i32_0 : i32, i32
  }
  func.func @transform_3(%arg0: i32) -> (i32, i32) {
    %c0_i32 = arith.constant 0 : i32
    %c0_i32_0 = arith.constant 0 : i32
    %c0_i32_1 = arith.constant 0 : i32
    return %c0_i32, %c0_i32_0 : i32, i32
  }
  func.func @transform_4(%arg0: i32) -> (i32, i32) {
    %c0_i32 = arith.constant 0 : i32
    %c0_i32_0 = arith.constant 0 : i32
    %c0_i32_1 = arith.constant 0 : i32
    return %c0_i32, %c0_i32_0 : i32, i32
  }
  func.func @transform_5(%arg0: i32) -> (i32, i32) {
    %c0_i32 = arith.constant 0 : i32
    %c0_i32_0 = arith.constant 0 : i32
    %c0_i32_1 = arith.constant 0 : i32
    return %c0_i32, %c0_i32_0 : i32, i32
  }
  func.func @transform_6(%arg0: i32) -> (i32, i32) {
    %c0_i32 = arith.constant 0 : i32
    %c0_i32_0 = arith.constant 0 : i32
    %c0_i32_1 = arith.constant 0 : i32
    return %c0_i32, %c0_i32_0 : i32, i32
  }
  func.func @transform_7(%arg0: i32) -> (i32, i32) {
    %c0_i32 = arith.constant 0 : i32
    %c0_i32_0 = arith.constant 0 : i32
    return %arg0, %c0_i32 : i32, i32
  }
}

</mosaic_0001>

<llo_original>
// kernel: tpu_custom_call.1
$region0: #{tpu_custom_call.1}
  #allocation0 [shape = 'u32[]', space=smem, size = 0x4, offset = 0x4, fixed_abs, tag = 'smem constant byte address 0x4 - core index']
  #allocation1 [shape = 'u32[144,128]{1,0:T(1,128)}', space=vmem, size = 0x12000, scoped, tag = 'internal scratch']
  %s0 = inlined_call_operand.vmem [shape: f32[4,8], index: 0, kind: input, shape index: {}]
  %s1 = inlined_call_operand.vmem [shape: f32[8,128], index: 1, kind: input, shape index: {}]
  %s2 = inlined_call_operand.vmem [shape: f32[1,128], index: 2, kind: input, shape index: {}]
  %s3 = inlined_call_operand.vmem [shape: f32[128,32], index: 3, kind: input, shape index: {}]
  %s4 = inlined_call_operand.vmem [shape: f32[1,32], index: 4, kind: input, shape index: {}]
  %s5 = inlined_call_operand.vmem [shape: f32[32,4], index: 5, kind: input, shape index: {}]
  %s6 = inlined_call_operand.vmem [shape: f32[1,4], index: 6, kind: input, shape index: {}]
  %s7 = inlined_call_operand.hbm [shape: f32[4,4], index: 7, kind: output, shape index: {}]
  %s8 = sld [smem:[#allocation0]]
  $region38: #{tpu_custom_call.1} parent=0
    _
  %s10 = ssub.s32 1, %s8
  %s11 = scalar_select 0, %s10, %s8
  $region1: #{tpu_custom_call.1} parent=0
    #allocation2 [shape = 'u8[2048]{0}', space=vmem, size = 0x800, scoped, tag = 'output window, operand 0, single buffered']
    #allocation3 [shape = 's32[1]{0}', space=sflag, size = 0x4, scoped, tag = 'scoped memory for tpu_custom_call.1']
    %12 = vsyncpa [#allocation3], 0
    // Predicated region
    $region2: #{tpu_custom_call.1} parent=1 // pred_check
      _
    $region3: #{tpu_custom_call.1} parent=1 // pred_check_branch
      %14 = sbr.rel (0) target = $region5
    $region4: #{tpu_custom_call.1} parent=1 // pred_region
      _
    $region5: #{tpu_custom_call.1} parent=1 // pred_fallthru
      _
    // Predicated region
    $region6: #{tpu_custom_call.1} parent=1 // pred_check
      _
    $region7: #{tpu_custom_call.1} parent=1 // pred_check_branch
      %16 = sbr.rel (0) target = $region9
    $region8: #{tpu_custom_call.1} parent=1 // pred_region
      _
    $region9: #{tpu_custom_call.1} parent=1 // pred_fallthru
      _
    // Predicated region
    $region10: #{tpu_custom_call.1} parent=1 // pred_check
      _
    $region11: #{tpu_custom_call.1} parent=1 // pred_check_branch
      %18 = sbr.rel (0) target = $region13
    $region12: #{tpu_custom_call.1} parent=1 // pred_region
      _
    $region13: #{tpu_custom_call.1} parent=1 // pred_fallthru
      _
    // Predicated region
    $region14: #{tpu_custom_call.1} parent=1 // pred_check
      _
    $region15: #{tpu_custom_call.1} parent=1 // pred_check_branch
      %20 = sbr.rel (0) target = $region17
    $region16: #{tpu_custom_call.1} parent=1 // pred_region
      _
    $region17: #{tpu_custom_call.1} parent=1 // pred_fallthru
      _
    // Predicated region
    $region18: #{tpu_custom_call.1} parent=1 // pred_check
      _
    $region19: #{tpu_custom_call.1} parent=1 // pred_check_branch
      %22 = sbr.rel (0) target = $region21
    $region20: #{tpu_custom_call.1} parent=1 // pred_region
      _
    $region21: #{tpu_custom_call.1} parent=1 // pred_fallthru
      _
    // Predicated region
    $region22: #{tpu_custom_call.1} parent=1 // pred_check
      _
    $region23: #{tpu_custom_call.1} parent=1 // pred_check_branch
      %24 = sbr.rel (0) target = $region25
    $region24: #{tpu_custom_call.1} parent=1 // pred_region
      _
    $region25: #{tpu_custom_call.1} parent=1 // pred_fallthru
      _
    // Predicated region
    $region26: #{tpu_custom_call.1} parent=1 // pred_check
      _
    $region27: #{tpu_custom_call.1} parent=1 // pred_check_branch
      %26 = sbr.rel (0) target = $region29
    $region28: #{tpu_custom_call.1} parent=1 // pred_region
      _
    $region29: #{tpu_custom_call.1} parent=1 // pred_fallthru
      _
    %v27 = vld [vmem:[%s1] sm:$0xff]
    %v28 = vld [vmem:[%s3] sm:$0xff]
    %v29 = vld [vmem:[%s3 + $0x8] sm:$0xff]
    %v30 = vld [vmem:[%s3 + $0x10] sm:$0xff]
    %v31 = vld [vmem:[%s3 + $0x18] sm:$0xff]
    %v32 = vld [vmem:[%s3 + $0x20] sm:$0xff]
    %v33 = vld [vmem:[%s3 + $0x28] sm:$0xff]
    %v34 = vld [vmem:[%s3 + $0x30] sm:$0xff]
    %v35 = vld [vmem:[%s3 + $0x38] sm:$0xff]
    %v36 = vld [vmem:[%s3 + $0x40] sm:$0xff]
    %v37 = vld [vmem:[%s3 + $0x48] sm:$0xff]
    %v38 = vld [vmem:[%s3 + $0x50] sm:$0xff]
    %v39 = vld [vmem:[%s3 + $0x58] sm:$0xff]
    %v40 = vld [vmem:[%s3 + $0x60] sm:$0xff]
    %v41 = vld [vmem:[%s3 + $0x68] sm:$0xff]
    %v42 = vld [vmem:[%s3 + $0x70] sm:$0xff]
    %v43 = vld [vmem:[%s3 + $0x78] sm:$0xff]
    %v44 = vld [vmem:[%s5] sm:$0xff]
    %v45 = vld [vmem:[%s5 + $0x8] sm:$0xff]
    %v46 = vld [vmem:[%s5 + $0x10] sm:$0xff]
    %v47 = vld [vmem:[%s5 + $0x18] sm:$0xff]
    %v48 = vld [vmem:[%s0] sm:$0xf]
    %v49 = vld [vmem:[%s2] sm:$0x1]
    %v51 = vlaneseq
    %v52 = vshrl.u32 %v51, 7
    %v53 = vsub.s32 0, %v52
    %v54 = vrot.slane %v49, %v53
    %vm56 = vcmask 64512
    %v58 = vsel %vm56, %v48, 0
    %60 = vmatprep.subr.mxu0 0.0
    %61 = vmatpush1.msra.mxu0 0.0
    %62 = vmatprep.subr.mxu0 0.0
    %63 = vmatpush1.msra.mxu0 0.0
    %64 = vmatprep.subr.mxu0 0.0
    %65 = vmatpush1.msra.mxu0 0.0
    %66 = vmatprep.subr.mxu0 0.0
    %67 = vmatpush1.msra.mxu0 0.0
    %68 = vmatprep.subr.mxu0 0.0
    %69 = vmatpush1.msra.mxu0 0.0
    %70 = vmatprep.subr.mxu0 0.0
    %71 = vmatpush1.msra.mxu0 0.0
    %72 = vmatprep.subr.mxu0 0.0
    %73 = vmatpush1.msra.mxu0 0.0
    %74 = vmatprep.subr.mxu0 0.0
    %75 = vmatpush1.msra.mxu0 0.0
    %76 = vmatprep.subr.mxu0 0.0
    %77 = vmatpush1.msra.mxu0 0.0
    %78 = vmatprep.subr.mxu0 0.0
    %79 = vmatpush1.msra.mxu0 0.0
    %80 = vmatprep.subr.mxu0 0.0
    %81 = vmatpush1.msra.mxu0 0.0
    %82 = vmatprep.subr.mxu0 0.0
    %83 = vmatpush1.msra.mxu0 0.0
    %84 = vmatprep.subr.mxu0 0.0
    %85 = vmatpush1.msra.mxu0 0.0
    %86 = vmatprep.subr.mxu0 0.0
    %87 = vmatpush1.msra.mxu0 0.0
    %88 = vmatprep.subr.mxu0 0.0
    %89 = vmatpush1.msra.mxu0 0.0
    %90 = vmatprep.subr.mxu0 0.0
    %91 = vmatpush1.msra.mxu0 %v27
    %92 = vmatprep.subr.mxu0 0.0
    %93 = vmatpush2.msra.mxu0 0.0
    %94 = vmatprep.subr.mxu0 0.0
    %95 = vmatpush2.msra.mxu0 0.0
    %96 = vmatprep.subr.mxu0 0.0
    %97 = vmatpush2.msra.mxu0 0.0
    %98 = vmatprep.subr.mxu0 0.0
    %99 = vmatpush2.msra.mxu0 0.0
    %100 = vmatprep.subr.mxu0 0.0
    %101 = vmatpush2.msra.mxu0 0.0
    %102 = vmatprep.subr.mxu0 0.0
    %103 = vmatpush2.msra.mxu0 0.0
    %104 = vmatprep.subr.mxu0 0.0
    %105 = vmatpush2.msra.mxu0 0.0
    %106 = vmatprep.subr.mxu0 0.0
    %107 = vmatpush2.msra.mxu0 0.0
    %108 = vmatprep.subr.mxu0 0.0
    %109 = vmatpush2.msra.mxu0 0.0
    %110 = vmatprep.subr.mxu0 0.0
    %111 = vmatpush2.msra.mxu0 0.0
    %112 = vmatprep.subr.mxu0 0.0
    %113 = vmatpush2.msra.mxu0 0.0
    %114 = vmatprep.subr.mxu0 0.0
    %115 = vmatpush2.msra.mxu0 0.0
    %116 = vmatprep.subr.mxu0 0.0
    %117 = vmatpush2.msra.mxu0 0.0
    %118 = vmatprep.subr.mxu0 0.0
    %119 = vmatpush2.msra.mxu0 0.0
    %120 = vmatprep.subr.mxu0 0.0
    %121 = vmatpush2.msra.mxu0 0.0
    %122 = vmatprep.subr.mxu0 0.0
    %123 = vmatpush2.msra.mxu0 0.0
    %124 = vmatprep.mubr.f32.mxu0 0.0
    %125 = vmatmul.mubr.f32.gmra.mxu0 %v58
    %v126 = vpop.f32.mrf.mxu0
    %v127 = vadd.f32 %v54, %v126
    %v128 = vpop.f32.mrf.mxu0
    %129 = vdwg.mxu0
    %v130 = vmax.f32 %v127, 0.0
    %v131 = vld [vmem:[%s4] sm:$0x1]
    %v133 = vlaneseq
    %v134 = vshrl.u32 %v133, 7
    %v135 = vsub.s32 0, %v134
    %v136 = vrot.slane %v131, %v135
    %138 = vmatprep.subr.mxu0 0.0
    %139 = vmatpush1.msra.mxu0 %v43
    %140 = vmatprep.subr.mxu0 0.0
    %141 = vmatpush1.msra.mxu0 %v42
    %142 = vmatprep.subr.mxu0 0.0
    %143 = vmatpush1.msra.mxu0 %v41
    %144 = vmatprep.subr.mxu0 0.0
    %145 = vmatpush1.msra.mxu0 %v40
    %146 = vmatprep.subr.mxu0 0.0
    %147 = vmatpush1.msra.mxu0 %v39
    %148 = vmatprep.subr.mxu0 0.0
    %149 = vmatpush1.msra.mxu0 %v38
    %150 = vmatprep.subr.mxu0 0.0
    %151 = vmatpush1.msra.mxu0 %v37
    %152 = vmatprep.subr.mxu0 0.0
    %153 = vmatpush1.msra.mxu0 %v36
    %154 = vmatprep.subr.mxu0 0.0
    %155 = vmatpush1.msra.mxu0 %v35
    %156 = vmatprep.subr.mxu0 0.0
    %157 = vmatpush1.msra.mxu0 %v34
    %158 = vmatprep.subr.mxu0 0.0
    %159 = vmatpush1.msra.mxu0 %v33
    %160 = vmatprep.subr.mxu0 0.0
    %161 = vmatpush1.msra.mxu0 %v32
    %162 = vmatprep.subr.mxu0 0.0
    %163 = vmatpush1.msra.mxu0 %v31
    %164 = vmatprep.subr.mxu0 0.0
    %165 = vmatpush1.msra.mxu0 %v30
    %166 = vmatprep.subr.mxu0 0.0
    %167 = vmatpush1.msra.mxu0 %v29
    %168 = vmatprep.subr.mxu0 0.0
    %169 = vmatpush1.msra.mxu0 %v28
    %170 = vmatprep.subr.mxu0 0.0
    %171 = vmatpush2.msra.mxu0 0.0
    %172 = vmatprep.subr.mxu0 0.0
    %173 = vmatpush2.msra.mxu0 0.0
    %174 = vmatprep.subr.mxu0 0.0
    %175 = vmatpush2.msra.mxu0 0.0
    %176 = vmatprep.subr.mxu0 0.0
    %177 = vmatpush2.msra.mxu0 0.0
    %178 = vmatprep.subr.mxu0 0.0
    %179 = vmatpush2.msra.mxu0 0.0
    %180 = vmatprep.subr.mxu0 0.0
    %181 = vmatpush2.msra.mxu0 0.0
    %182 = vmatprep.subr.mxu0 0.0
    %183 = vmatpush2.msra.mxu0 0.0
    %184 = vmatprep.subr.mxu0 0.0
    %185 = vmatpush2.msra.mxu0 0.0
    %186 = vmatprep.subr.mxu0 0.0
    %187 = vmatpush2.msra.mxu0 0.0
    %188 = vmatprep.subr.mxu0 0.0
    %189 = vmatpush2.msra.mxu0 0.0
    %190 = vmatprep.subr.mxu0 0.0
    %191 = vmatpush2.msra.mxu0 0.0
    %192 = vmatprep.subr.mxu0 0.0
    %193 = vmatpush2.msra.mxu0 0.0
    %194 = vmatprep.subr.mxu0 0.0
    %195 = vmatpush2.msra.mxu0 0.0
    %196 = vmatprep.subr.mxu0 0.0
    %197 = vmatpush2.msra.mxu0 0.0
    %198 = vmatprep.subr.mxu0 0.0
    %199 = vmatpush2.msra.mxu0 0.0
    %200 = vmatprep.subr.mxu0 0.0
    %201 = vmatpush2.msra.mxu0 0.0
    %202 = vmatprep.mubr.f32.mxu0 0.0
    %203 = vmatmul.mubr.f32.gmra.mxu0 %v130
    %v204 = vpop.f32.mrf.mxu0
    %v205 = vadd.f32 %v136, %v204
    %v206 = vpop.f32.mrf.mxu0
    %207 = vdwg.mxu0
    %v208 = vmax.f32 %v205, 0.0
    %v209 = vld [vmem:[%s6] sm:$0x1]
    %v211 = vlaneseq
    %v212 = vshrl.u32 %v211, 7
    %v213 = vsub.s32 0, %v212
    %v214 = vrot.slane %v209, %v213
    %vm216 = vcmask 261120
    %v218 = vsel %vm216, %v208, 0
    %220 = vmatprep.subr.mxu0 0.0
    %221 = vmatpush1.msra.mxu0 0.0
    %222 = vmatprep.subr.mxu0 0.0
    %223 = vmatpush1.msra.mxu0 0.0
    %224 = vmatprep.subr.mxu0 0.0
    %225 = vmatpush1.msra.mxu0 0.0
    %226 = vmatprep.subr.mxu0 0.0
    %227 = vmatpush1.msra.mxu0 0.0
    %228 = vmatprep.subr.mxu0 0.0
    %229 = vmatpush1.msra.mxu0 0.0
    %230 = vmatprep.subr.mxu0 0.0
    %231 = vmatpush1.msra.mxu0 0.0
    %232 = vmatprep.subr.mxu0 0.0
    %233 = vmatpush1.msra.mxu0 0.0
    %234 = vmatprep.subr.mxu0 0.0
    %235 = vmatpush1.msra.mxu0 0.0
    %236 = vmatprep.subr.mxu0 0.0
    %237 = vmatpush1.msra.mxu0 0.0
    %238 = vmatprep.subr.mxu0 0.0
    %239 = vmatpush1.msra.mxu0 0.0
    %240 = vmatprep.subr.mxu0 0.0
    %241 = vmatpush1.msra.mxu0 0.0
    %242 = vmatprep.subr.mxu0 0.0
    %243 = vmatpush1.msra.mxu0 0.0
    %244 = vmatprep.subr.mxu0 0.0
    %245 = vmatpush1.msra.mxu0 %v47
    %246 = vmatprep.subr.mxu0 0.0
    %247 = vmatpush1.msra.mxu0 %v46
    %248 = vmatprep.subr.mxu0 0.0
    %249 = vmatpush1.msra.mxu0 %v45
    %250 = vmatprep.subr.mxu0 0.0
    %251 = vmatpush1.msra.mxu0 %v44
    %252 = vmatprep.subr.mxu0 0.0
    %253 = vmatpush2.msra.mxu0 0.0
    %254 = vmatprep.subr.mxu0 0.0
    %255 = vmatpush2.msra.mxu0 0.0
    %256 = vmatprep.subr.mxu0 0.0
    %257 = vmatpush2.msra.mxu0 0.0
    %258 = vmatprep.subr.mxu0 0.0
    %259 = vmatpush2.msra.mxu0 0.0
    %260 = vmatprep.subr.mxu0 0.0
    %261 = vmatpush2.msra.mxu0 0.0
    %262 = vmatprep.subr.mxu0 0.0
    %263 = vmatpush2.msra.mxu0 0.0
    %264 = vmatprep.subr.mxu0 0.0
    %265 = vmatpush2.msra.mxu0 0.0
    %266 = vmatprep.subr.mxu0 0.0
    %267 = vmatpush2.msra.mxu0 0.0
    %268 = vmatprep.subr.mxu0 0.0
    %269 = vmatpush2.msra.mxu0 0.0
    %270 = vmatprep.subr.mxu0 0.0
    %271 = vmatpush2.msra.mxu0 0.0
    %272 = vmatprep.subr.mxu0 0.0
    %273 = vmatpush2.msra.mxu0 0.0
    %274 = vmatprep.subr.mxu0 0.0
    %275 = vmatpush2.msra.mxu0 0.0
    %276 = vmatprep.subr.mxu0 0.0
    %277 = vmatpush2.msra.mxu0 0.0
    %278 = vmatprep.subr.mxu0 0.0
    %279 = vmatpush2.msra.mxu0 0.0
    %280 = vmatprep.subr.mxu0 0.0
    %281 = vmatpush2.msra.mxu0 0.0
    %282 = vmatprep.subr.mxu0 0.0
    %283 = vmatpush2.msra.mxu0 0.0
    %284 = vmatprep.mubr.f32.mxu0 0.0
    %285 = vmatmul.mubr.f32.gmra.mxu0 %v218
    %v286 = vpop.f32.mrf.mxu0
    %v287 = vadd.f32 %v214, %v286
    %v288 = vpop.f32.mrf.mxu0
    %289 = vdwg.mxu0
    %vm290 = vcmask 27648
    %291 = vst.msk [vmem:[#allocation2] sm:$0xf] %vm290, %v287
    // Predicated region
    $region30: #{tpu_custom_call.1} parent=1 // pred_check
      _
    $region31: #{tpu_custom_call.1} parent=1 // pred_check_branch
      %293 = sbr.rel (0) target = $region33
    $region32: #{tpu_custom_call.1} parent=1 // pred_region
      %s295 = ssub.s32 64, 64
      %296 = vsyncadd [#allocation3], %s295
      %s298 = sshll.u32 [#allocation2], 4
      %s299 = int_to_ptr.vmem [resolvable:$true] %s298
      %301 = dma.vmem_to_hbm [thread:$0]  %s299, 64, %s7, [#allocation3]
    $region33: #{tpu_custom_call.1} parent=1 // pred_fallthru
      _
    // Predicated region
    $region34: #{tpu_custom_call.1} parent=1 // pred_check
      _
    $region35: #{tpu_custom_call.1} parent=1 // pred_check_branch
      %303 = sbr.rel (0) target = $region37
    $region36: #{tpu_custom_call.1} parent=1 // pred_region
      %304 = dma.done [#allocation3], 64
    $region37: #{tpu_custom_call.1} parent=1 // pred_fallthru
      _
    %305 = vsyncpa [#allocation3], 1

</llo_original>
